<compile_context>
chip_gen: v7x
topology: tpu7x:2x2x1
jax: 0.10.0
libtpu: 0.0.40
codegen_flags: <defaults>
</compile_context>

<pallas_src>
import math

import jax
import jax.numpy as jnp
from jax.experimental import pallas as pl
from jax.experimental.pallas import tpu as pltpu


def sinusoidal_pe(length, d_model):
    # TODO(synk): PositionalEncoder internals are not given; assumed standard sinusoidal
    # encoding over the m depot positions, returned (add=False) broadcast over batch.
    position = jnp.arange(length, dtype=jnp.float32)[:, None]
    div_term = jnp.exp(
        jnp.arange(0, d_model, 2, dtype=jnp.float32) * (-math.log(10000.0) / d_model)
    )
    pe = jnp.zeros((length, d_model), dtype=jnp.float32)
    pe = pe.at[:, 0::2].set(jnp.sin(position * div_term))
    pe = pe.at[:, 1::2].set(jnp.cos(position * div_term))
    return pe


def _pvrp_init_embed_kernel(feats_ref, pref_ref, w_ref, wp_ref, nodes_ref, pref_out_ref):
    # All node embeddings (depots + clients) for this batch tile: one MXU matmul,
    # bf16 operands, f32 accumulate.
    nodes_ref[...] = jnp.dot(
        feats_ref[...], w_ref[...], preferred_element_type=jnp.float32
    ).astype(nodes_ref.dtype)
    # Preference embedding: Linear(1, D) without bias == rank-1 outer product.  Pushed
    # through the (otherwise idle) MXU to keep the vector side free for the output stores;
    # f32 accumulate, bf16 store (the dominant HBM write).
    pref_out_ref[...] = jnp.dot(
        pref_ref[...], wp_ref[...], preferred_element_type=jnp.float32
    ).astype(pref_out_ref.dtype)


def _align_up(v, a):
    return ((v + a - 1) // a) * a


def pvrp_seq_init_embedding(locs, capacity, speed, demand, agents_preference, params,
                            *, demand_scaler=40.0, speed_scaler=1.0,
                            preference_scaler=1.0, batch_tile=64,
                            node_dtype=jnp.float32, pref_dtype=jnp.bfloat16):
    f32 = jnp.float32
    bf16 = jnp.bfloat16
    locs = locs.astype(f32)
    B, L, _ = locs.shape
    m = speed.shape[-1]
    N = L - m
    D = params["w_depot"].shape[-1]
    F = 9 + m  # [dep_x, dep_y, cap, spd, cli_x, cli_y, dem, dist, ang, one_hot(m)]

    # ---- fold all batch-independent linear algebra into one [F, D] weight ----------
    wda = params["w_depot_agents"].astype(f32)
    wda_dep, wda_agt = wda[:D], wda[D:]
    wa = params["w_agents"].astype(f32)
    wc = params["w_clients"].astype(f32)
    alpha = params["alpha"].astype(f32).reshape(())

    w_da_xy = params["w_depot"].astype(f32) @ wda_dep + wa[:2] @ wda_agt      # [2, D]
    row_cap = (wa[2:3] @ wda_agt) / demand_scaler                             # [1, D]
    row_spd = (wa[3:4] @ wda_agt) / speed_scaler                              # [1, D]
    row_dem = wc[2:3] / demand_scaler                                         # [1, D]
    pos_bias = (alpha * (sinusoidal_pe(m, D) @ params["w_pos_proj"].astype(f32))) @ wda_dep
    w_full = jnp.concatenate(
        [w_da_xy, row_cap, row_spd, wc[:2], row_dem, wc[3:4], wc[4:5], pos_bias],
        axis=0,
    ).astype(bf16)                                                            # [F, D]
    wp_scaled = params["w_pref"].astype(f32) / preference_scaler              # [1, D]

    # ---- per-batch feature packing (plain JAX glue) ---------------------------------
    depot_locs = locs[:, :m, :]                                               # [B, m, 2]
    clients_locs = locs[:, m:, :]                                             # [B, N, 2]
    centered = clients_locs - depot_locs[:, 0:1, :]
    dist = jnp.linalg.norm(centered, axis=-1, keepdims=True)                  # [B, N, 1]
    # TODO(synk): torch.atan2 has no verified Mosaic lowering; computed here in plain JAX.
    ang = jnp.arctan2(centered[..., 1:2], centered[..., 0:1])                 # [B, N, 1]
    dem = demand.astype(f32)[:, 0, m:][..., None]                             # [B, N, 1]

    one_hot = jnp.broadcast_to(jnp.eye(m, dtype=f32), (B, m, m))
    depot_feats = jnp.concatenate(
        [depot_locs, capacity.astype(f32)[..., None], speed.astype(f32)[..., None],
         jnp.zeros((B, m, 5), f32), one_hot], axis=-1)                        # [B, m, F]
    client_feats = jnp.concatenate(
        [jnp.zeros((B, N, 4), f32), clients_locs, dem, dist, ang,
         jnp.zeros((B, N, m), f32)], axis=-1)                                 # [B, N, F]
    node_feats = jnp.concatenate([depot_feats, client_feats], axis=1)         # [B, L, F]
    pref = agents_preference.astype(f32)                                      # [B, m, N]

    # ---- batch tiling: TB batch elements per grid step ------------------------------
    TB = max(1, min(batch_tile, B))
    if B >= 2:
        TB = min(TB, (B + 1) // 2)  # >= 2 grid steps so both v7x TensorCores get work
    # keep the second-to-minor block dims sublane (8) aligned when multi-step
    r = 1
    for dim in (L, m * N):
        need = 8 // math.gcd(dim, 8)
        r = r * need // math.gcd(r, need)
    TB = _align_up(TB, r)
    Bp = _align_up(B, TB)
    if Bp != B:  # pad with zero rows; their (finite) outputs are sliced off below
        node_feats = jnp.pad(node_feats, ((0, Bp - B), (0, 0), (0, 0)))
        pref = jnp.pad(pref, ((0, Bp - B), (0, 0), (0, 0)))

    feats_flat = node_feats.reshape(Bp * L, F).astype(bf16)
    pref_flat = pref.reshape(Bp * m * N, 1)   # f32; lane-sparse operand (see header note)

    grid = (Bp // TB,)
    in_specs = [
        pl.BlockSpec((TB * L, F), lambda b: (b, 0)),       # packed node features (bf16)
        pl.BlockSpec((TB * m * N, 1), lambda b: (b, 0)),   # packed preferences
        pl.BlockSpec((F, D), lambda b: (0, 0)),            # fused node weight (shared)
        pl.BlockSpec((1, D), lambda b: (0, 0)),            # scaled w_pref (shared)
    ]
    out_specs = (
        pl.BlockSpec((TB * L, D), lambda b: (b, 0)),
        pl.BlockSpec((TB * m * N, D), lambda b: (b, 0)),
    )
    out_shape = (
        jax.ShapeDtypeStruct((Bp * L, D), node_dtype),
        jax.ShapeDtypeStruct((Bp * m * N, D), pref_dtype),
    )

    # VMEM budget at default TB=64 (double-buffered): pref-in ~12 MiB, pref-out bf16 ~6 MiB,
    # nodes ~2 MiB, feats bf16 ~1 MiB, weights <1 MiB  => ~21 MiB << 48 MiB limit (v7x-safe).
    nodes_flat, pref_out_flat = pl.pallas_call(
        _pvrp_init_embed_kernel,
        grid=grid,
        in_specs=in_specs,
        out_specs=out_specs,
        out_shape=out_shape,
        compiler_params=pltpu.CompilerParams(
            dimension_semantics=("parallel",),
            vmem_limit_bytes=48 * 1024 * 1024,
        ),
    )(feats_flat, pref_flat, w_full, wp_scaled)

    nodes = nodes_flat.reshape(Bp, L, D)[:B]
    pref_embed = pref_out_flat.reshape(Bp, m, N, D)[:B]
    return nodes, pref_embed


def reference_forward(locs, capacity, speed, demand, agents_preference, params,
                      *, demand_scaler=40.0, speed_scaler=1.0, preference_scaler=1.0):
    # Pure-JAX mirror of the PyTorch forward (for verification).
    m = speed.shape[-1]
    D = params["w_depot"].shape[-1]
    depot_locs = locs[:, :m, :]
    agents_locs = locs[:, :m, :]
    clients_locs = locs[:, m:, :]
    depots_embedding = depot_locs @ params["w_depot"]
    pos_embedding = jnp.broadcast_to(sinusoidal_pe(m, D), depots_embedding.shape)
    pos_embedding = params["alpha"][0, 0] * (pos_embedding @ params["w_pos_proj"])
    depot_embedding = depots_embedding + pos_embedding
    agents_feats = jnp.concatenate(
        [agents_locs, capacity[..., None] / demand_scaler, speed[..., None] / speed_scaler],
        axis=-1)
    agents_embedding = agents_feats @ params["w_agents"]
    depot_agents_feats = jnp.concatenate([depot_embedding, agents_embedding], axis=-1)
    depot_agents_embedding = depot_agents_feats @ params["w_depot_agents"]
    demands = demand[:, 0, m:]
    clients_feats = jnp.concatenate(
        [clients_locs, demands[..., None] / demand_scaler], axis=-1)
    depot = depot_locs[:, 0:1, :]
    centered = clients_locs - depot
    dist = jnp.linalg.norm(centered, axis=-1, keepdims=True)
    angle = jnp.arctan2(centered[..., 1:], centered[..., :1])
    clients_feats = jnp.concatenate([clients_feats, dist, angle], axis=-1)
    clients_embedding = clients_feats @ params["w_clients"]
    preferences = agents_preference / preference_scaler
    preference_embed = preferences[..., None] * params["w_pref"][0]
    nodes_embedding = jnp.concatenate([depot_agents_embedding, clients_embedding], axis=1)
    return nodes_embedding, preference_embed


if __name__ == "__main__":
    D = 128
    m, N = 8, 24
    L = m + N

    def make_inputs(B, key):
        k_loc, k_cap, k_spd, k_dem, k_pref = jax.random.split(key, 5)
        locs = jax.random.uniform(k_loc, (B, L, 2), dtype=jnp.float32)
        capacity = jax.random.uniform(k_cap, (B, m), jnp.float32, minval=10.0, maxval=40.0)
        speed = jax.random.uniform(k_spd, (B, m), jnp.float32, minval=0.5, maxval=1.0)
        demand = jax.random.uniform(k_dem, (B, 1, L), jnp.float32, minval=1.0, maxval=10.0)
        pref = jax.random.uniform(k_pref, (B, m, N), dtype=jnp.float32)
        return locs, capacity, speed, demand, pref

    key = jax.random.PRNGKey(0)
    k_in1, k_in2, k_par = jax.random.split(key, 3)

    wk = jax.random.split(k_par, 6)
    scale = 0.1
    params = {
        "w_depot": scale * jax.random.normal(wk[0], (2, D), jnp.float32),
        "w_pos_proj": scale * jax.random.normal(wk[1], (D, D), jnp.float32),
        "w_agents": scale * jax.random.normal(wk[2], (4, D), jnp.float32),
        "w_depot_agents": scale * jax.random.normal(wk[3], (2 * D, D), jnp.float32),
        "w_clients": scale * jax.random.normal(wk[4], (5, D), jnp.float32),
        "w_pref": scale * jax.random.normal(wk[5], (1, D), jnp.float32),
        "alpha": jnp.ones((1, 1), jnp.float32),   # nn.Parameter(torch.Tensor([1]))
    }

    # --- small case: TB capped to ceil(B/2) => 2-step parallel grid ------------------
    B1 = 4
    inputs1 = make_inputs(B1, k_in1)
    nodes, pref_embed = pvrp_seq_init_embedding(*inputs1, params)
    jax.block_until_ready((nodes, pref_embed))
    ref_nodes, ref_pref = reference_forward(*inputs1, params)
    assert nodes.shape == (B1, L, D) and pref_embed.shape == (B1, m, N, D)
    assert pref_embed.dtype == jnp.bfloat16
    assert bool(jnp.all(jnp.isfinite(nodes)))
    assert bool(jnp.all(jnp.isfinite(pref_embed.astype(jnp.float32))))
    assert jnp.allclose(nodes, ref_nodes, atol=5e-2, rtol=5e-2)
    assert jnp.allclose(pref_embed.astype(jnp.float32), ref_pref, atol=5e-2, rtol=5e-2)

    # --- multi-step grid with batch padding (exercises TB tiling) --------------------
    B2 = 40
    inputs2 = make_inputs(B2, k_in2)
    nodes2, pref_embed2 = pvrp_seq_init_embedding(*inputs2, params, batch_tile=16)
    jax.block_until_ready((nodes2, pref_embed2))
    ref_nodes2, ref_pref2 = reference_forward(*inputs2, params)
    assert nodes2.shape == (B2, L, D) and pref_embed2.shape == (B2, m, N, D)
    assert jnp.allclose(nodes2, ref_nodes2, atol=5e-2, rtol=5e-2)
    assert jnp.allclose(pref_embed2.astype(jnp.float32), ref_pref2, atol=5e-2, rtol=5e-2)

    print("KERNEL_OK")
</pallas_src>

<mosaic_0001>
module attributes {stable_mosaic.version = 11 : i64} {
  func.func @_pvrp_init_embed_kernel(%arg0: i32, %arg1: memref<64x17xbf16, #tpu.memory_space<vmem>>, %arg2: memref<384x1xf32, #tpu.memory_space<vmem>>, %arg3: memref<17x128xbf16, #tpu.memory_space<vmem>>, %arg4: memref<1x128xf32, #tpu.memory_space<vmem>>, %arg5: memref<64x128xf32, #tpu.memory_space<vmem>>, %arg6: memref<384x128xbf16, #tpu.memory_space<vmem>>) attributes {dimension_semantics = [#tpu.dimension_semantics<parallel>], iteration_bounds = array<i64: 2>, scalar_prefetch = 0 : i64, scratch_operands = 0 : i64, tpu.core_type = #tpu.core_type<tc>, window_params = [{transform_indices = @transform_0, window_bounds = array<i64: 64, 17>}, {transform_indices = @transform_1, window_bounds = array<i64: 384, 1>}, {pipeline_mode = #tpu.pipeline_mode<synchronous>, transform_indices = @transform_2, window_bounds = array<i64: 17, 128>}, {pipeline_mode = #tpu.pipeline_mode<synchronous>, transform_indices = @transform_3, window_bounds = array<i64: 1, 128>}, {transform_indices = @transform_4, window_bounds = array<i64: 64, 128>}, {transform_indices = @transform_5, window_bounds = array<i64: 384, 128>}]} {
    %c0 = arith.constant 0 : index
    %c0_0 = arith.constant 0 : index
    %0 = vector.load %arg1[%c0, %c0_0] : memref<64x17xbf16, #tpu.memory_space<vmem>>, vector<64x17xbf16>
    %c0_1 = arith.constant 0 : index
    %c0_2 = arith.constant 0 : index
    %1 = vector.load %arg3[%c0_1, %c0_2] : memref<17x128xbf16, #tpu.memory_space<vmem>>, vector<17x128xbf16>
    %cst = arith.constant dense<0.000000e+00> : vector<64x128xf32>
    %2 = tpu.matmul %0, %1, %cst {dimension_numbers = #tpu.dot_dimension_numbers<[1], [0], [0], [1], [0, 0, 1, 1], [], []>} : vector<64x17xbf16>, vector<17x128xbf16>, vector<64x128xf32> -> vector<64x128xf32>
    %c0_3 = arith.constant 0 : index
    %c0_4 = arith.constant 0 : index
    %3 = vector.load %arg5[%c0_3, %c0_4] : memref<64x128xf32, #tpu.memory_space<vmem>>, vector<64x128xf32>
    tpu.vector_store %arg5[%c0_3, %c0_4], %2 {strides = array<i32>} : memref<64x128xf32, #tpu.memory_space<vmem>>, vector<64x128xf32>,
    %c0_5 = arith.constant 0 : index
    %c0_6 = arith.constant 0 : index
    %4 = vector.load %arg2[%c0_5, %c0_6] : memref<384x1xf32, #tpu.memory_space<vmem>>, vector<384x1xf32>
    %c0_7 = arith.constant 0 : index
    %c0_8 = arith.constant 0 : index
    %5 = vector.load %arg4[%c0_7, %c0_8] : memref<1x128xf32, #tpu.memory_space<vmem>>, vector<1x128xf32>
    %cst_9 = arith.constant dense<0.000000e+00> : vector<384x128xf32>
    %6 = tpu.matmul %4, %5, %cst_9 {dimension_numbers = #tpu.dot_dimension_numbers<[1], [0], [0], [1], [0, 0, 1, 1], [], []>} : vector<384x1xf32>, vector<1x128xf32>, vector<384x128xf32> -> vector<384x128xf32>
    %7 = arith.truncf %6 : vector<384x128xf32> to vector<384x128xbf16>
    %c0_10 = arith.constant 0 : index
    %c0_11 = arith.constant 0 : index
    %8 = vector.load %arg6[%c0_10, %c0_11] : memref<384x128xbf16, #tpu.memory_space<vmem>>, vector<384x128xbf16>
    tpu.vector_store %arg6[%c0_10, %c0_11], %7 {strides = array<i32>} : memref<384x128xbf16, #tpu.memory_space<vmem>>, vector<384x128xbf16>,
    return
  }
  func.func @transform_0(%arg0: i32) -> (i32, i32) {
    %c0_i32 = arith.constant 0 : i32
    %c0_i32_0 = arith.constant 0 : i32
    return %arg0, %c0_i32 : i32, i32
  }
  func.func @transform_1(%arg0: i32) -> (i32, i32) {
    %c0_i32 = arith.constant 0 : i32
    %c0_i32_0 = arith.constant 0 : i32
    return %arg0, %c0_i32 : i32, i32
  }
  func.func @transform_2(%arg0: i32) -> (i32, i32) {
    %c0_i32 = arith.constant 0 : i32
    %c0_i32_0 = arith.constant 0 : i32
    %c0_i32_1 = arith.constant 0 : i32
    return %c0_i32, %c0_i32_0 : i32, i32
  }
  func.func @transform_3(%arg0: i32) -> (i32, i32) {
    %c0_i32 = arith.constant 0 : i32
    %c0_i32_0 = arith.constant 0 : i32
    %c0_i32_1 = arith.constant 0 : i32
    return %c0_i32, %c0_i32_0 : i32, i32
  }
  func.func @transform_4(%arg0: i32) -> (i32, i32) {
    %c0_i32 = arith.constant 0 : i32
    %c0_i32_0 = arith.constant 0 : i32
    return %arg0, %c0_i32 : i32, i32
  }
  func.func @transform_5(%arg0: i32) -> (i32, i32) {
    %c0_i32 = arith.constant 0 : i32
    %c0_i32_0 = arith.constant 0 : i32
    return %arg0, %c0_i32 : i32, i32
  }
}

</mosaic_0001>

<llo_original>
// kernel: tpu_custom_call.1
$region0: #{tpu_custom_call.1}
  #allocation0 [shape = 'u32[]', space=smem, size = 0x4, offset = 0x4, fixed_abs, tag = 'smem constant byte address 0x4 - core index']
  #allocation1 [shape = 'u32[144,128]{1,0:T(1,128)}', space=vmem, size = 0x12000, scoped, tag = 'internal scratch']
  %s0 = inlined_call_operand.vmem [shape: bf16[128,17], index: 0, kind: input, shape index: {}]
  %s1 = inlined_call_operand.vmem [shape: f32[768,1], index: 1, kind: input, shape index: {}]
  %s2 = inlined_call_operand.vmem [shape: bf16[17,128], index: 2, kind: input, shape index: {}]
  %s3 = inlined_call_operand.vmem [shape: f32[1,128], index: 3, kind: input, shape index: {}]
  %s4 = inlined_call_operand.hbm [shape: f32[128,128], index: 4, kind: output, shape index: {0}]
  %s5 = inlined_call_operand.hbm [shape: bf16[768,128], index: 5, kind: output, shape index: {1}]
  %6 = xla_tuple %s4, %s5
  %s7 = sld [smem:[#allocation0]]
  $region57: #{tpu_custom_call.1} parent=0
    _
  %s9 = ssub.s32 1, %s7
  %s10 = scalar_select 0, %s9, %s7
  $region1: #{tpu_custom_call.1} parent=0
    #allocation2 [shape = 'u8[65536]{0}', space=vmem, size = 0x10000, scoped, tag = 'output window, operand 0']
    #allocation3 [shape = 's32[2]{0}', space=sflag, size = 0x8, scoped, tag = 'scoped memory for tpu_custom_call.1']
    #allocation4 [shape = 'u8[196608]{0}', space=vmem, size = 0x30000, scoped, tag = 'output window, operand 1']
    #allocation5 [shape = 's32[2]{0}', space=sflag, size = 0x8, scoped, tag = 'scoped memory for tpu_custom_call.1']
    %11 = vsyncpa [#allocation3], 0
    %s12 = scalar_lea.sflag [#allocation3], 1
    %13 = vsyncpa %s12, 0
    %14 = vsyncpa [#allocation5], 0
    %s15 = scalar_lea.sflag [#allocation5], 1
    %16 = vsyncpa %s15, 0
    loop: start=0, step=1, limit=4
    $region2: #{tpu_custom_call.1} parent=1 // loop_pre_header
      _
    $region3: #{tpu_custom_call.1} parent=1 // loop_header
      %s18 = sphi 0, %s22
      %p19 = scmp.ge.s32.totalorder %s18, 4
      %s28 = sphi 0, %s30
      %s31 = sphi 0, %s28
      %s32 = sphi 0, %s31
      %s48 = sphi 0, %s32
      %s54 = sphi 0, %s56
      %s57 = sphi 0, %s54
      %s58 = sphi 0, %s57
      %s74 = sphi 0, %s58
      %s78 = sphi 0, %s78
      %s80 = sphi 0, %s78
      %s81 = sphi 0, %s80
      %s95 = sphi 0, %s81
      %s99 = sphi 0, %s99
      %s101 = sphi 0, %s99
      %s102 = sphi 0, %s101
      %s116 = sphi 0, %s102
      %s122 = sphi 0, %s124
      %s125 = sphi 0, %s122
      %s126 = sphi 0, %s125
      %s142 = sphi 0, %s126
      %s148 = sphi 0, %s150
      %s151 = sphi 0, %s148
      %s152 = sphi 0, %s151
      %s168 = sphi 0, %s152
    $region4: #{tpu_custom_call.1} parent=1 // loop_header_branch
      %21 = sbr.rel (%p19) target = $region8
    $region5: #{tpu_custom_call.1} parent=1 // loop_body
      %s23 = ssub.s32 %s18, 1
      %s24 = ssub.s32 %s18, 2
      %s25 = sadd.s32 %s18, 1
      %s26 = ssub.s32 %s18, %s25
      %p27 = scmp.eq.s32.totalorder %s26, 0
      %s29 = sadd.s32 %s28, 1
      %s30 = scalar_select %p27, %s28, %s29
      %p33 = pneg %p27
      %p34 = scmp.eq.s32.totalorder %s18, 1
      %p35 = por %p33, %p34
      %p36 = scmp.ne.s32.totalorder %s28, %s31
      %p37 = scmp.eq.s32.totalorder %s18, 0
      %p38 = por %p36, %p37
      %p39 = scmp.ne.s32.totalorder %s28, %s31
      %p40 = scmp.eq.s32.totalorder %s23, 1
      %p41 = por %p39, %p40
      %p42 = scmp.ne.s32.totalorder %s31, %s32
      %p43 = scmp.eq.s32.totalorder %s23, 0
      %p44 = por %p42, %p43
      %p45 = scmp.ne.s32.totalorder %s31, %s32
      %p46 = scmp.eq.s32.totalorder %s24, 1
      %p47 = por %p45, %p46
      %p49 = scmp.ne.s32.totalorder %s32, %s48
      %p50 = scmp.eq.s32.totalorder %s24, 0
      %p51 = por %p49, %p50
      %s52 = ssub.s32 %s18, %s25
      %p53 = scmp.eq.s32.totalorder %s52, 0
      %s55 = sadd.s32 %s54, 1
      %s56 = scalar_select %p53, %s54, %s55
      %p59 = pneg %p53
      %p60 = scmp.eq.s32.totalorder %s18, 1
      %p61 = por %p59, %p60
      %p62 = scmp.ne.s32.totalorder %s54, %s57
      %p63 = scmp.eq.s32.totalorder %s18, 0
      %p64 = por %p62, %p63
      %p65 = scmp.ne.s32.totalorder %s54, %s57
      %p66 = scmp.eq.s32.totalorder %s23, 1
      %p67 = por %p65, %p66
      %p68 = scmp.ne.s32.totalorder %s57, %s58
      %p69 = scmp.eq.s32.totalorder %s23, 0
      %p70 = por %p68, %p69
      %p71 = scmp.ne.s32.totalorder %s57, %s58
      %p72 = scmp.eq.s32.totalorder %s24, 1
      %p73 = por %p71, %p72
      %p75 = scmp.ne.s32.totalorder %s58, %s74
      %p76 = scmp.eq.s32.totalorder %s24, 0
      %p77 = por %p75, %p76
      %s79 = sadd.s32 %s78, 1
      %p82 = scmp.eq.s32.totalorder %s18, 1
      %p83 = scmp.ne.s32.totalorder %s78, %s80
      %p84 = scmp.eq.s32.totalorder %s18, 0
      %p85 = por %p83, %p84
      %p86 = scmp.ne.s32.totalorder %s78, %s80
      %p87 = scmp.eq.s32.totalorder %s23, 1
      %p88 = por %p86, %p87
      %p89 = scmp.ne.s32.totalorder %s80, %s81
      %p90 = scmp.eq.s32.totalorder %s23, 0
      %p91 = por %p89, %p90
      %p92 = scmp.ne.s32.totalorder %s80, %s81
      %p93 = scmp.eq.s32.totalorder %s24, 1
      %p94 = por %p92, %p93
      %p96 = scmp.ne.s32.totalorder %s81, %s95
      %p97 = scmp.eq.s32.totalorder %s24, 0
      %p98 = por %p96, %p97
      %s100 = sadd.s32 %s99, 1
      %p103 = scmp.eq.s32.totalorder %s18, 1
      %p104 = scmp.ne.s32.totalorder %s99, %s101
      %p105 = scmp.eq.s32.totalorder %s18, 0
      %p106 = por %p104, %p105
      %p107 = scmp.ne.s32.totalorder %s99, %s101
      %p108 = scmp.eq.s32.totalorder %s23, 1
      %p109 = por %p107, %p108
      %p110 = scmp.ne.s32.totalorder %s101, %s102
      %p111 = scmp.eq.s32.totalorder %s23, 0
      %p112 = por %p110, %p111
      %p113 = scmp.ne.s32.totalorder %s101, %s102
      %p114 = scmp.eq.s32.totalorder %s24, 1
      %p115 = por %p113, %p114
      %p117 = scmp.ne.s32.totalorder %s102, %s116
      %p118 = scmp.eq.s32.totalorder %s24, 0
      %p119 = por %p117, %p118
      %s120 = ssub.s32 %s18, %s25
      %p121 = scmp.eq.s32.totalorder %s120, 0
      %s123 = sadd.s32 %s122, 1
      %s124 = scalar_select %p121, %s122, %s123
      %p127 = pneg %p121
      %p128 = scmp.eq.s32.totalorder %s18, 1
      %p129 = por %p127, %p128
      %p130 = scmp.ne.s32.totalorder %s122, %s125
      %p131 = scmp.eq.s32.totalorder %s18, 0
      %p132 = por %p130, %p131
      %p133 = scmp.ne.s32.totalorder %s122, %s125
      %p134 = scmp.eq.s32.totalorder %s23, 1
      %p135 = por %p133, %p134
      %p136 = scmp.ne.s32.totalorder %s125, %s126
      %p137 = scmp.eq.s32.totalorder %s23, 0
      %p138 = por %p136, %p137
      %p139 = scmp.ne.s32.totalorder %s125, %s126
      %p140 = scmp.eq.s32.totalorder %s24, 1
      %p141 = por %p139, %p140
      %p143 = scmp.ne.s32.totalorder %s126, %s142
      %p144 = scmp.eq.s32.totalorder %s24, 0
      %p145 = por %p143, %p144
      %s146 = ssub.s32 %s18, %s25
      %p147 = scmp.eq.s32.totalorder %s146, 0
      %s149 = sadd.s32 %s148, 1
      %s150 = scalar_select %p147, %s148, %s149
      %p153 = pneg %p147
      %p154 = scmp.eq.s32.totalorder %s18, 1
      %p155 = por %p153, %p154
      %p156 = scmp.ne.s32.totalorder %s148, %s151
      %p157 = scmp.eq.s32.totalorder %s18, 0
      %p158 = por %p156, %p157
      %p159 = scmp.ne.s32.totalorder %s148, %s151
      %p160 = scmp.eq.s32.totalorder %s23, 1
      %p161 = por %p159, %p160
      %p162 = scmp.ne.s32.totalorder %s151, %s152
      %p163 = scmp.eq.s32.totalorder %s23, 0
      %p164 = por %p162, %p163
      %p165 = scmp.ne.s32.totalorder %s151, %s152
      %p166 = scmp.eq.s32.totalorder %s24, 1
      %p167 = por %p165, %p166
      %p169 = scmp.ne.s32.totalorder %s152, %s168
      %p170 = scmp.eq.s32.totalorder %s24, 0
      %p171 = por %p169, %p170
      %p172 = scmp.le.s32.totalorder 1, %s18
      %p173 = scmp.lt.s32.totalorder %s18, 3
      %p174 = pnand %p172, %p173
      %p175 = pneg %p174
      // Predicated region
      $region9: #{tpu_custom_call.1} parent=5 // pred_check
        _
      $region10: #{tpu_custom_call.1} parent=5 // pred_check_branch
        %177 = sbr.rel (%p174) target = $region12
      $region11: #{tpu_custom_call.1} parent=5 // pred_region
        %s178 = ssub.s32 %s18, 1
        // Predicated region
        $region13: #{tpu_custom_call.1} parent=11 // pred_check
          %p179 = pneg %p91
        $region14: #{tpu_custom_call.1} parent=11 // pred_check_branch
          %181 = sbr.rel (%p179) target = $region16
        $region15: #{tpu_custom_call.1} parent=11 // pred_region
          _
        $region16: #{tpu_custom_call.1} parent=11 // pred_fallthru
          _
        // Predicated region
        $region17: #{tpu_custom_call.1} parent=11 // pred_check
          %p182 = pneg %p112
        $region18: #{tpu_custom_call.1} parent=11 // pred_check_branch
          %184 = sbr.rel (%p182) target = $region20
        $region19: #{tpu_custom_call.1} parent=11 // pred_region
          _
        $region20: #{tpu_custom_call.1} parent=11 // pred_fallthru
          _
      $region12: #{tpu_custom_call.1} parent=5 // pred_fallthru
        _
      %p185 = scmp.lt.s32.totalorder %s18, 2
      // Predicated region
      $region21: #{tpu_custom_call.1} parent=5 // pred_check
        %p186 = pneg %p185
      $region22: #{tpu_custom_call.1} parent=5 // pred_check_branch
        %188 = sbr.rel (%p186) target = $region24
      $region23: #{tpu_custom_call.1} parent=5 // pred_region
        // Predicated region
        $region25: #{tpu_custom_call.1} parent=23 // pred_check
          %p189 = pneg %p38
        $region26: #{tpu_custom_call.1} parent=23 // pred_check_branch
          %191 = sbr.rel (%p189) target = $region28
        $region27: #{tpu_custom_call.1} parent=23 // pred_region
          %s192 = smul.u32 8, %s18
          %p193 = scmp.lt.s32.totalorder %s192, 15
          %s194 = scalar_select %p193, %s192, 15
          %s195 = smul.addr %s194, 4
          %s196 = scalar_lea.vmem %s0, %s195
          %s197 = smul.u32 8, %s18
        $region28: #{tpu_custom_call.1} parent=23 // pred_fallthru
          _
        // Predicated region
        $region29: #{tpu_custom_call.1} parent=23 // pred_check
          %p198 = pneg %p64
        $region30: #{tpu_custom_call.1} parent=23 // pred_check_branch
          %200 = sbr.rel (%p198) target = $region32
        $region31: #{tpu_custom_call.1} parent=23 // pred_region
          %s201 = smul.u32 48, %s18
          %p202 = scmp.lt.s32.totalorder %s201, 95
          %s203 = scalar_select %p202, %s201, 95
          %s204 = smul.addr %s203, 8
          %s205 = scalar_lea.vmem %s1, %s204
          %s206 = smul.u32 48, %s18
        $region32: #{tpu_custom_call.1} parent=23 // pred_fallthru
          _
      $region24: #{tpu_custom_call.1} parent=5 // pred_fallthru
        _
      %p207 = scmp.le.s32.totalorder 1, %s18
      %p208 = scmp.lt.s32.totalorder %s18, 3
      %p209 = pnand %p207, %p208
      %p210 = pneg %p209
      // Predicated region
      $region33: #{tpu_custom_call.1} parent=5 // pred_check
        _
      $region34: #{tpu_custom_call.1} parent=5 // pred_check_branch
        %212 = sbr.rel (%p209) target = $region36
      $region35: #{tpu_custom_call.1} parent=5 // pred_region
        %s213 = ssub.s32 %s18, 1
        %s214 = smul.u32 8, %s23
        %p215 = scmp.lt.s32.totalorder %s214, 15
        %s216 = scalar_select %p215, %s214, 15
        %s217 = smul.addr %s216, 4
        %s218 = scalar_lea.vmem %s0, %s217
        %p219 = pneg %p44
        %p220 = pneg %p41
        %s221 = smul.u32 48, %s23
        %p222 = scmp.lt.s32.totalorder %s221, 95
        %s223 = scalar_select %p222, %s221, 95
        %s224 = smul.addr %s223, 8
        %s225 = scalar_lea.vmem %s1, %s224
        %p226 = pneg %p70
        %p227 = pneg %p67
        %p228 = pneg %p91
        %p229 = pneg %p88
        %p230 = pneg %p112
        %p231 = pneg %p109
        %p232 = pneg %p138
        %p233 = pneg %p135
        %s234 = sand.u32 %s125, 1
        %s235 = scalar_lea.sflag [#allocation3], %s234
        %s236 = sand.u32 %s125, 1
        %s237 = smul.addr %s236, 64
        %s238 = scalar_lea.vmem [#allocation2], %s237
        %p239 = pneg %p164
        %p240 = pneg %p161
        %s241 = sand.u32 %s151, 1
        %s242 = scalar_lea.sflag [#allocation5], %s241
        %s243 = sand.u32 %s151, 1
        %s244 = smul.addr %s243, 192
        %s245 = scalar_lea.vmem [#allocation4], %s244
        %s246 = smul.u32 8, %s23
        %p247 = scmp.lt.s32.totalorder %s246, 15
        %s248 = scalar_select %p247, %s246, 15
        %s249 = smul.addr %s248, 4
        %s250 = scalar_lea.vmem %s0, %s249
        %s251 = smul.u32 8, %s23
        %s252 = smul.u32 48, %s23
        %p253 = scmp.lt.s32.totalorder %s252, 95
        %s254 = scalar_select %p253, %s252, 95
        %s255 = smul.addr %s254, 8
        %s256 = scalar_lea.vmem %s1, %s255
        %s257 = smul.u32 48, %s23
        %s258 = smul.u32 8, %s23
        %s259 = smul.u32 48, %s23
        %v261 = vld [vmem:[%s250] sm:$0xf]
        %v262 = vld [vmem:[%s250 + $0x4] sm:$0xf]
        %v263 = vld [vmem:[%s250 + $0x8] sm:$0xf]
        %v264 = vld [vmem:[%s250 + $0xc] sm:$0xf]
        %v265 = vld [vmem:[%s250 + $0x10] sm:$0xf]
        %v266 = vld [vmem:[%s250 + $0x14] sm:$0xf]
        %v267 = vld [vmem:[%s250 + $0x18] sm:$0xf]
        %v268 = vld [vmem:[%s250 + $0x1c] sm:$0xf]
        %v269 = vld [vmem:[%s2] sm:$0xf]
        %v270 = vld [vmem:[%s2 + $0x4] sm:$0xf]
        %v271 = vld [vmem:[%s2 + $0x8] sm:$0x1]
        %v280 = vunpack.c.l.b16 %v261
        %v281 = vunpack.c.l.b16 %v262
        %v282 = vunpack.c.l.b16 %v263
        %v283 = vunpack.c.l.b16 %v264
        %v284 = vunpack.c.l.b16 %v265
        %v285 = vunpack.c.l.b16 %v266
        %v286 = vunpack.c.l.b16 %v267
        %v287 = vunpack.c.l.b16 %v268
        %v288 = vpack.c.b16 %v281, %v280
        %v289 = vpack.c.b16 %v283, %v282
        %v290 = vpack.c.b16 %v285, %v284
        %v291 = vpack.c.b16 %v287, %v286
        %v295 = vunpack.c.l.b16 %v269
        %v296 = vunpack.c.l.b16 %v270
        %v297 = vunpack.c.l.b16 %v271
        %v298 = vpack.c.b16 %v296, %v295
        %v299 = vpack.c.b16 %v297, %v297
        %vm301 = vcmask 138240
        %v303 = vsel %vm301, %v288, 0
        %v306 = vsel %vm301, %v289, 0
        %v309 = vsel %vm301, %v290, 0
        %v312 = vsel %vm301, %v291, 0
        %vm314 = vcmask 1040384
        %v315 = vsel 0, 4294967295, 65535
        %v316 = vsel %vm314, %v315, 0
        %v318 = vand.u32 %v299, %v316
        %320 = vmatprep.subr.bf16.mxu0 0
        %321 = vmatpush1.bf16.msra.mxu0 %v298
        %322 = vmatprep.subr.bf16.mxu0 0
        %323 = vmatpush1.bf16.msra.mxu0 %v318
        %324 = vmatprep.subr.bf16.mxu0 0
        %325 = vmatpush1.bf16.msra.mxu0 0
        %326 = vmatprep.subr.bf16.mxu0 0
        %327 = vmatpush1.bf16.msra.mxu0 0
        %328 = vmatprep.subr.bf16.mxu0 0
        %329 = vmatpush1.bf16.msra.mxu0 0
        %330 = vmatprep.subr.bf16.mxu0 0
        %331 = vmatpush1.bf16.msra.mxu0 0
        %332 = vmatprep.subr.bf16.mxu0 0
        %333 = vmatpush1.bf16.msra.mxu0 0
        %334 = vmatprep.subr.bf16.mxu0 0
        %335 = vmatpush1.bf16.msra.mxu0 0
        %336 = vmatprep.subr.bf16.mxu0 0
        %337 = vmatpush1.bf16.msra.mxu0 0
        %338 = vmatprep.subr.bf16.mxu0 0
        %339 = vmatpush1.bf16.msra.mxu0 0
        %340 = vmatprep.subr.bf16.mxu0 0
        %341 = vmatpush1.bf16.msra.mxu0 0
        %342 = vmatprep.subr.bf16.mxu0 0
        %343 = vmatpush1.bf16.msra.mxu0 0
        %344 = vmatprep.subr.bf16.mxu0 0
        %345 = vmatpush1.bf16.msra.mxu0 0
        %346 = vmatprep.subr.bf16.mxu0 0
        %347 = vmatpush1.bf16.msra.mxu0 0
        %348 = vmatprep.subr.bf16.mxu0 0
        %349 = vmatpush1.bf16.msra.mxu0 0
        %350 = vmatprep.subr.bf16.mxu0 0
        %351 = vmatpush1.bf16.msra.mxu0 0
        %352 = vmatprep.mubr.bf16.mxu0 0
        %353 = vmatmul.mubr.bf16.gmra.mrb[0].mxu0 %v303
        %v354 = vpop.f32.mrb[0].mxu0
        %v355 = vadd.f32 0.0, %v354
        %v356 = vpop.f32.mrb[0].mxu0
        %v357 = vpop.f32.mrb[0].mxu0
        %v358 = vadd.f32 0.0, %v357
        %v359 = vpop.f32.mrb[0].mxu0
        %360 = vmatprep.mubr.bf16.mxu0 0
        %361 = vmatmul.mubr.bf16.gmra.mrb[0].mxu0 %v306
        %v362 = vpop.f32.mrb[0].mxu0
        %v363 = vadd.f32 0.0, %v362
        %v364 = vpop.f32.mrb[0].mxu0
        %v365 = vpop.f32.mrb[0].mxu0
        %v366 = vadd.f32 0.0, %v365
        %v367 = vpop.f32.mrb[0].mxu0
        %368 = vmatprep.mubr.bf16.mxu0 0
        %369 = vmatmul.mubr.bf16.gmra.mrb[0].mxu0 %v309
        %v370 = vpop.f32.mrb[0].mxu0
        %v371 = vadd.f32 0.0, %v370
        %v372 = vpop.f32.mrb[0].mxu0
        %v373 = vpop.f32.mrb[0].mxu0
        %v374 = vadd.f32 0.0, %v373
        %v375 = vpop.f32.mrb[0].mxu0
        %376 = vmatprep.mubr.bf16.mxu0 0
        %377 = vmatmul.mubr.bf16.gmra.mrb[0].mxu0 %v312
        %v378 = vpop.f32.mrb[0].mxu0
        %v379 = vadd.f32 0.0, %v378
        %v380 = vpop.f32.mrb[0].mxu0
        %v381 = vpop.f32.mrb[0].mxu0
        %v382 = vadd.f32 0.0, %v381
        %v383 = vpop.f32.mrb[0].mxu0
        %384 = vdwg.mxu0
        %385 = vst [vmem:[%s238] sm:$0xff] %v355
        %386 = vst [vmem:[%s238 + $0x8] sm:$0xff] %v358
        %387 = vst [vmem:[%s238 + $0x10] sm:$0xff] %v363
        %388 = vst [vmem:[%s238 + $0x18] sm:$0xff] %v366
        %389 = vst [vmem:[%s238 + $0x20] sm:$0xff] %v371
        %390 = vst [vmem:[%s238 + $0x28] sm:$0xff] %v374
        %391 = vst [vmem:[%s238 + $0x30] sm:$0xff] %v379
        %392 = vst [vmem:[%s238 + $0x38] sm:$0xff] %v382
        %v393 = vld [vmem:[%s256] sm:$0xff]
        %v394 = vld [vmem:[%s256 + $0x8] sm:$0xff]
        %v395 = vld [vmem:[%s256 + $0x10] sm:$0xff]
        %v396 = vld [vmem:[%s256 + $0x18] sm:$0xff]
        %v397 = vld [vmem:[%s256 + $0x20] sm:$0xff]
        %v398 = vld [vmem:[%s256 + $0x28] sm:$0xff]
        %v399 = vld [vmem:[%s256 + $0x30] sm:$0xff]
        %v400 = vld [vmem:[%s256 + $0x38] sm:$0xff]
        %v401 = vld [vmem:[%s256 + $0x40] sm:$0xff]
        %v402 = vld [vmem:[%s256 + $0x48] sm:$0xff]
        %v403 = vld [vmem:[%s256 + $0x50] sm:$0xff]
        %v404 = vld [vmem:[%s256 + $0x58] sm:$0xff]
        %v405 = vld [vmem:[%s256 + $0x60] sm:$0xff]
        %v406 = vld [vmem:[%s256 + $0x68] sm:$0xff]
        %v407 = vld [vmem:[%s256 + $0x70] sm:$0xff]
        %v408 = vld [vmem:[%s256 + $0x78] sm:$0xff]
        %v409 = vld [vmem:[%s256 + $0x80] sm:$0xff]
        %v410 = vld [vmem:[%s256 + $0x88] sm:$0xff]
        %v411 = vld [vmem:[%s256 + $0x90] sm:$0xff]
        %v412 = vld [vmem:[%s256 + $0x98] sm:$0xff]
        %v413 = vld [vmem:[%s256 + $0xa0] sm:$0xff]
        %v414 = vld [vmem:[%s256 + $0xa8] sm:$0xff]
        %v415 = vld [vmem:[%s256 + $0xb0] sm:$0xff]
        %v416 = vld [vmem:[%s256 + $0xb8] sm:$0xff]
        %v417 = vld [vmem:[%s256 + $0xc0] sm:$0xff]
        %v418 = vld [vmem:[%s256 + $0xc8] sm:$0xff]
        %v419 = vld [vmem:[%s256 + $0xd0] sm:$0xff]
        %v420 = vld [vmem:[%s256 + $0xd8] sm:$0xff]
        %v421 = vld [vmem:[%s256 + $0xe0] sm:$0xff]
        %v422 = vld [vmem:[%s256 + $0xe8] sm:$0xff]
        %v423 = vld [vmem:[%s256 + $0xf0] sm:$0xff]
        %v424 = vld [vmem:[%s256 + $0xf8] sm:$0xff]
        %v425 = vld [vmem:[%s256 + $0x100] sm:$0xff]
        %v426 = vld [vmem:[%s256 + $0x108] sm:$0xff]
        %v427 = vld [vmem:[%s256 + $0x110] sm:$0xff]
        %v428 = vld [vmem:[%s256 + $0x118] sm:$0xff]
        %v429 = vld [vmem:[%s256 + $0x120] sm:$0xff]
        %v430 = vld [vmem:[%s256 + $0x128] sm:$0xff]
        %v431 = vld [vmem:[%s256 + $0x130] sm:$0xff]
        %v432 = vld [vmem:[%s256 + $0x138] sm:$0xff]
        %v433 = vld [vmem:[%s256 + $0x140] sm:$0xff]
        %v434 = vld [vmem:[%s256 + $0x148] sm:$0xff]
        %v435 = vld [vmem:[%s256 + $0x150] sm:$0xff]
        %v436 = vld [vmem:[%s256 + $0x158] sm:$0xff]
        %v437 = vld [vmem:[%s256 + $0x160] sm:$0xff]
        %v438 = vld [vmem:[%s256 + $0x168] sm:$0xff]
        %v439 = vld [vmem:[%s256 + $0x170] sm:$0xff]
        %v440 = vld [vmem:[%s256 + $0x178] sm:$0xff]
        %v441 = vld [vmem:[%s3] sm:$0x1]
        %vm442 = vcmask 7168
        %v444 = vsel %vm442, %v393, 0
        %v447 = vsel %vm442, %v394, 0
        %v450 = vsel %vm442, %v395, 0
        %v453 = vsel %vm442, %v396, 0
        %v456 = vsel %vm442, %v397, 0
        %v459 = vsel %vm442, %v398, 0
        %v462 = vsel %vm442, %v399, 0
        %v465 = vsel %vm442, %v400, 0
        %v468 = vsel %vm442, %v401, 0
        %v471 = vsel %vm442, %v402, 0
        %v474 = vsel %vm442, %v403, 0
        %v477 = vsel %vm442, %v404, 0
        %v480 = vsel %vm442, %v405, 0
        %v483 = vsel %vm442, %v406, 0
        %v486 = vsel %vm442, %v407, 0
        %v489 = vsel %vm442, %v408, 0
        %v492 = vsel %vm442, %v409, 0
        %v495 = vsel %vm442, %v410, 0
        %v498 = vsel %vm442, %v411, 0
        %v501 = vsel %vm442, %v412, 0
        %v504 = vsel %vm442, %v413, 0
        %v507 = vsel %vm442, %v414, 0
        %v510 = vsel %vm442, %v415, 0
        %v513 = vsel %vm442, %v416, 0
        %v516 = vsel %vm442, %v417, 0
        %v519 = vsel %vm442, %v418, 0
        %v522 = vsel %vm442, %v419, 0
        %v525 = vsel %vm442, %v420, 0
        %v528 = vsel %vm442, %v421, 0
        %v531 = vsel %vm442, %v422, 0
        %v534 = vsel %vm442, %v423, 0
        %v537 = vsel %vm442, %v424, 0
        %v540 = vsel %vm442, %v425, 0
        %v543 = vsel %vm442, %v426, 0
        %v546 = vsel %vm442, %v427, 0
        %v549 = vsel %vm442, %v428, 0
        %v552 = vsel %vm442, %v429, 0
        %v555 = vsel %vm442, %v430, 0
        %v558 = vsel %vm442, %v431, 0
        %v561 = vsel %vm442, %v432, 0
        %v564 = vsel %vm442, %v433, 0
        %v567 = vsel %vm442, %v434, 0
        %v570 = vsel %vm442, %v435, 0
        %v573 = vsel %vm442, %v436, 0
        %v576 = vsel %vm442, %v437, 0
        %v579 = vsel %vm442, %v438, 0
        %v582 = vsel %vm442, %v439, 0
        %v585 = vsel %vm442, %v440, 0
        %v588 = vsel %vm314, %v441, 0
        %590 = vmatprep.subr.mxu0 0.0
        %591 = vmatpush1.msra.mxu0 %v588
        %592 = vmatprep.subr.mxu0 0.0
        %593 = vmatpush1.msra.mxu0 0.0
        %594 = vmatprep.subr.mxu0 0.0
        %595 = vmatpush1.msra.mxu0 0.0
        %596 = vmatprep.subr.mxu0 0.0
        %597 = vmatpush1.msra.mxu0 0.0
        %598 = vmatprep.subr.mxu0 0.0
        %599 = vmatpush1.msra.mxu0 0.0
        %600 = vmatprep.subr.mxu0 0.0
        %601 = vmatpush1.msra.mxu0 0.0
        %602 = vmatprep.subr.mxu0 0.0
        %603 = vmatpush1.msra.mxu0 0.0
        %604 = vmatprep.subr.mxu0 0.0
        %605 = vmatpush1.msra.mxu0 0.0
        %606 = vmatprep.subr.mxu0 0.0
        %607 = vmatpush1.msra.mxu0 0.0
        %608 = vmatprep.subr.mxu0 0.0
        %609 = vmatpush1.msra.mxu0 0.0
        %610 = vmatprep.subr.mxu0 0.0
        %611 = vmatpush1.msra.mxu0 0.0
        %612 = vmatprep.subr.mxu0 0.0
        %613 = vmatpush1.msra.mxu0 0.0
        %614 = vmatprep.subr.mxu0 0.0
        %615 = vmatpush1.msra.mxu0 0.0
        %616 = vmatprep.subr.mxu0 0.0
        %617 = vmatpush1.msra.mxu0 0.0
        %618 = vmatprep.subr.mxu0 0.0
        %619 = vmatpush1.msra.mxu0 0.0
        %620 = vmatprep.subr.mxu0 0.0
        %621 = vmatpush1.msra.mxu0 0.0
        %622 = vmatprep.subr.mxu0 0.0
        %623 = vmatpush1.msra.mxu0 0.0
        %624 = vmatprep.subr.mxu0 0.0
        %625 = vmatpush1.msra.mxu0 0.0
        %626 = vmatprep.subr.mxu0 0.0
        %627 = vmatpush1.msra.mxu0 0.0
        %628 = vmatprep.subr.mxu0 0.0
        %629 = vmatpush1.msra.mxu0 0.0
        %630 = vmatprep.subr.mxu0 0.0
        %631 = vmatpush1.msra.mxu0 0.0
        %632 = vmatprep.subr.mxu0 0.0
        %633 = vmatpush1.msra.mxu0 0.0
        %634 = vmatprep.subr.mxu0 0.0
        %635 = vmatpush1.msra.mxu0 0.0
        %636 = vmatprep.subr.mxu0 0.0
        %637 = vmatpush1.msra.mxu0 0.0
        %638 = vmatprep.subr.mxu0 0.0
        %639 = vmatpush1.msra.mxu0 0.0
        %640 = vmatprep.subr.mxu0 0.0
        %641 = vmatpush1.msra.mxu0 0.0
        %642 = vmatprep.subr.mxu0 0.0
        %643 = vmatpush1.msra.mxu0 0.0
        %644 = vmatprep.subr.mxu0 0.0
        %645 = vmatpush1.msra.mxu0 0.0
        %646 = vmatprep.subr.mxu0 0.0
        %647 = vmatpush1.msra.mxu0 0.0
        %648 = vmatprep.subr.mxu0 0.0
        %649 = vmatpush1.msra.mxu0 0.0
        %650 = vmatprep.subr.mxu0 0.0
        %651 = vmatpush1.msra.mxu0 0.0
        %652 = vmatprep.subr.mxu0 0.0
        %653 = vmatpush1.msra.mxu0 0.0
        %654 = vmatprep.mubr.f32.mxu0 0.0
        %655 = vmatmul.mubr.f32.gmra.mrb[0].mxu0 %v444
        %v656 = vpop.f32.mrb[0].mxu0
        %v657 = vadd.f32 0.0, %v656
        %v658 = vpop.f32.mrb[0].mxu0
        %659 = vmatprep.mubr.f32.mxu0 0.0
        %660 = vmatmul.mubr.f32.gmra.mrb[0].mxu0 %v447
        %v661 = vpop.f32.mrb[0].mxu0
        %v662 = vadd.f32 0.0, %v661
        %v663 = vpop.f32.mrb[0].mxu0
        %664 = vmatprep.mubr.f32.mxu0 0.0
        %665 = vmatmul.mubr.f32.gmra.mrb[0].mxu0 %v450
        %v666 = vpop.f32.mrb[0].mxu0
        %v667 = vadd.f32 0.0, %v666
        %v668 = vpop.f32.mrb[0].mxu0
        %669 = vmatprep.mubr.f32.mxu0 0.0
        %670 = vmatmul.mubr.f32.gmra.mrb[0].mxu0 %v453
        %v671 = vpop.f32.mrb[0].mxu0
        %v672 = vadd.f32 0.0, %v671
        %v673 = vpop.f32.mrb[0].mxu0
        %674 = vmatprep.mubr.f32.mxu0 0.0
        %675 = vmatmul.mubr.f32.gmra.mrb[0].mxu0 %v456
        %v676 = vpop.f32.mrb[0].mxu0
        %v677 = vadd.f32 0.0, %v676
        %v678 = vpop.f32.mrb[0].mxu0
        %679 = vmatprep.mubr.f32.mxu0 0.0
        %680 = vmatmul.mubr.f32.gmra.mrb[0].mxu0 %v459
        %v681 = vpop.f32.mrb[0].mxu0
        %v682 = vadd.f32 0.0, %v681
        %v683 = vpop.f32.mrb[0].mxu0
        %684 = vmatprep.mubr.f32.mxu0 0.0
        %685 = vmatmul.mubr.f32.gmra.mrb[0].mxu0 %v462
        %v686 = vpop.f32.mrb[0].mxu0
        %v687 = vadd.f32 0.0, %v686
        %v688 = vpop.f32.mrb[0].mxu0
        %689 = vmatprep.mubr.f32.mxu0 0.0
        %690 = vmatmul.mubr.f32.gmra.mrb[0].mxu0 %v465
        %v691 = vpop.f32.mrb[0].mxu0
        %v692 = vadd.f32 0.0, %v691
        %v693 = vpop.f32.mrb[0].mxu0
        %694 = vmatprep.mubr.f32.mxu0 0.0
        %695 = vmatmul.mubr.f32.gmra.mrb[0].mxu0 %v468
        %v696 = vpop.f32.mrb[0].mxu0
        %v697 = vadd.f32 0.0, %v696
        %v698 = vpop.f32.mrb[0].mxu0
        %699 = vmatprep.mubr.f32.mxu0 0.0
        %700 = vmatmul.mubr.f32.gmra.mrb[0].mxu0 %v471
        %v701 = vpop.f32.mrb[0].mxu0
        %v702 = vadd.f32 0.0, %v701
        %v703 = vpop.f32.mrb[0].mxu0
        %704 = vmatprep.mubr.f32.mxu0 0.0
        %705 = vmatmul.mubr.f32.gmra.mrb[0].mxu0 %v474
        %v706 = vpop.f32.mrb[0].mxu0
        %v707 = vadd.f32 0.0, %v706
        %v708 = vpop.f32.mrb[0].mxu0
        %709 = vmatprep.mubr.f32.mxu0 0.0
        %710 = vmatmul.mubr.f32.gmra.mrb[0].mxu0 %v477
        %v711 = vpop.f32.mrb[0].mxu0
        %v712 = vadd.f32 0.0, %v711
        %v713 = vpop.f32.mrb[0].mxu0
        %714 = vmatprep.mubr.f32.mxu0 0.0
        %715 = vmatmul.mubr.f32.gmra.mrb[0].mxu0 %v480
        %v716 = vpop.f32.mrb[0].mxu0
        %v717 = vadd.f32 0.0, %v716
        %v718 = vpop.f32.mrb[0].mxu0
        %719 = vmatprep.mubr.f32.mxu0 0.0
        %720 = vmatmul.mubr.f32.gmra.mrb[0].mxu0 %v483
        %v721 = vpop.f32.mrb[0].mxu0
        %v722 = vadd.f32 0.0, %v721
        %v723 = vpop.f32.mrb[0].mxu0
        %724 = vmatprep.mubr.f32.mxu0 0.0
        %725 = vmatmul.mubr.f32.gmra.mrb[0].mxu0 %v486
        %v726 = vpop.f32.mrb[0].mxu0
        %v727 = vadd.f32 0.0, %v726
        %v728 = vpop.f32.mrb[0].mxu0
        %729 = vmatprep.mubr.f32.mxu0 0.0
        %730 = vmatmul.mubr.f32.gmra.mrb[0].mxu0 %v489
        %v731 = vpop.f32.mrb[0].mxu0
        %v732 = vadd.f32 0.0, %v731
        %v733 = vpop.f32.mrb[0].mxu0
        %734 = vmatprep.mubr.f32.mxu0 0.0
        %735 = vmatmul.mubr.f32.gmra.mrb[0].mxu0 %v492
        %v736 = vpop.f32.mrb[0].mxu0
        %v737 = vadd.f32 0.0, %v736
        %v738 = vpop.f32.mrb[0].mxu0
        %739 = vmatprep.mubr.f32.mxu0 0.0
        %740 = vmatmul.mubr.f32.gmra.mrb[0].mxu0 %v495
        %v741 = vpop.f32.mrb[0].mxu0
        %v742 = vadd.f32 0.0, %v741
        %v743 = vpop.f32.mrb[0].mxu0
        %744 = vmatprep.mubr.f32.mxu0 0.0
        %745 = vmatmul.mubr.f32.gmra.mrb[0].mxu0 %v498
        %v746 = vpop.f32.mrb[0].mxu0
        %v747 = vadd.f32 0.0, %v746
        %v748 = vpop.f32.mrb[0].mxu0
        %749 = vmatprep.mubr.f32.mxu0 0.0
        %750 = vmatmul.mubr.f32.gmra.mrb[0].mxu0 %v501
        %v751 = vpop.f32.mrb[0].mxu0
        %v752 = vadd.f32 0.0, %v751
        %v753 = vpop.f32.mrb[0].mxu0
        %754 = vmatprep.mubr.f32.mxu0 0.0
        %755 = vmatmul.mubr.f32.gmra.mrb[0].mxu0 %v504
        %v756 = vpop.f32.mrb[0].mxu0
        %v757 = vadd.f32 0.0, %v756
        %v758 = vpop.f32.mrb[0].mxu0
        %759 = vmatprep.mubr.f32.mxu0 0.0
        %760 = vmatmul.mubr.f32.gmra.mrb[0].mxu0 %v507
        %v761 = vpop.f32.mrb[0].mxu0
        %v762 = vadd.f32 0.0, %v761
        %v763 = vpop.f32.mrb[0].mxu0
        %764 = vmatprep.mubr.f32.mxu0 0.0
        %765 = vmatmul.mubr.f32.gmra.mrb[0].mxu0 %v510
        %v766 = vpop.f32.mrb[0].mxu0
        %v767 = vadd.f32 0.0, %v766
        %v768 = vpop.f32.mrb[0].mxu0
        %769 = vmatprep.mubr.f32.mxu0 0.0
        %770 = vmatmul.mubr.f32.gmra.mrb[0].mxu0 %v513
        %v771 = vpop.f32.mrb[0].mxu0
        %v772 = vadd.f32 0.0, %v771
        %v773 = vpop.f32.mrb[0].mxu0
        %774 = vmatprep.mubr.f32.mxu0 0.0
        %775 = vmatmul.mubr.f32.gmra.mrb[0].mxu0 %v516
        %v776 = vpop.f32.mrb[0].mxu0
        %v777 = vadd.f32 0.0, %v776
        %v778 = vpop.f32.mrb[0].mxu0
        %779 = vmatprep.mubr.f32.mxu0 0.0
        %780 = vmatmul.mubr.f32.gmra.mrb[0].mxu0 %v519
        %v781 = vpop.f32.mrb[0].mxu0
        %v782 = vadd.f32 0.0, %v781
        %v783 = vpop.f32.mrb[0].mxu0
        %784 = vmatprep.mubr.f32.mxu0 0.0
        %785 = vmatmul.mubr.f32.gmra.mrb[0].mxu0 %v522
        %v786 = vpop.f32.mrb[0].mxu0
        %v787 = vadd.f32 0.0, %v786
        %v788 = vpop.f32.mrb[0].mxu0
        %789 = vmatprep.mubr.f32.mxu0 0.0
        %790 = vmatmul.mubr.f32.gmra.mrb[0].mxu0 %v525
        %v791 = vpop.f32.mrb[0].mxu0
        %v792 = vadd.f32 0.0, %v791
        %v793 = vpop.f32.mrb[0].mxu0
        %794 = vmatprep.mubr.f32.mxu0 0.0
        %795 = vmatmul.mubr.f32.gmra.mrb[0].mxu0 %v528
        %v796 = vpop.f32.mrb[0].mxu0
        %v797 = vadd.f32 0.0, %v796
        %v798 = vpop.f32.mrb[0].mxu0
        %799 = vmatprep.mubr.f32.mxu0 0.0
        %800 = vmatmul.mubr.f32.gmra.mrb[0].mxu0 %v531
        %v801 = vpop.f32.mrb[0].mxu0
        %v802 = vadd.f32 0.0, %v801
        %v803 = vpop.f32.mrb[0].mxu0
        %804 = vmatprep.mubr.f32.mxu0 0.0
        %805 = vmatmul.mubr.f32.gmra.mrb[0].mxu0 %v534
        %v806 = vpop.f32.mrb[0].mxu0
        %v807 = vadd.f32 0.0, %v806
        %v808 = vpop.f32.mrb[0].mxu0
        %809 = vmatprep.mubr.f32.mxu0 0.0
        %810 = vmatmul.mubr.f32.gmra.mrb[0].mxu0 %v537
        %v811 = vpop.f32.mrb[0].mxu0
        %v812 = vadd.f32 0.0, %v811
        %v813 = vpop.f32.mrb[0].mxu0
        %814 = vmatprep.mubr.f32.mxu0 0.0
        %815 = vmatmul.mubr.f32.gmra.mrb[0].mxu0 %v540
        %v816 = vpop.f32.mrb[0].mxu0
        %v817 = vadd.f32 0.0, %v816
        %v818 = vpop.f32.mrb[0].mxu0
        %819 = vmatprep.mubr.f32.mxu0 0.0
        %820 = vmatmul.mubr.f32.gmra.mrb[0].mxu0 %v543
        %v821 = vpop.f32.mrb[0].mxu0
        %v822 = vadd.f32 0.0, %v821
        %v823 = vpop.f32.mrb[0].mxu0
        %824 = vmatprep.mubr.f32.mxu0 0.0
        %825 = vmatmul.mubr.f32.gmra.mrb[0].mxu0 %v546
        %v826 = vpop.f32.mrb[0].mxu0
        %v827 = vadd.f32 0.0, %v826
        %v828 = vpop.f32.mrb[0].mxu0
        %829 = vmatprep.mubr.f32.mxu0 0.0
        %830 = vmatmul.mubr.f32.gmra.mrb[0].mxu0 %v549
        %v831 = vpop.f32.mrb[0].mxu0
        %v832 = vadd.f32 0.0, %v831
        %v833 = vpop.f32.mrb[0].mxu0
        %834 = vmatprep.mubr.f32.mxu0 0.0
        %835 = vmatmul.mubr.f32.gmra.mrb[0].mxu0 %v552
        %v836 = vpop.f32.mrb[0].mxu0
        %v837 = vadd.f32 0.0, %v836
        %v838 = vpop.f32.mrb[0].mxu0
        %839 = vmatprep.mubr.f32.mxu0 0.0
        %840 = vmatmul.mubr.f32.gmra.mrb[0].mxu0 %v555
        %v841 = vpop.f32.mrb[0].mxu0
        %v842 = vadd.f32 0.0, %v841
        %v843 = vpop.f32.mrb[0].mxu0
        %844 = vmatprep.mubr.f32.mxu0 0.0
        %845 = vmatmul.mubr.f32.gmra.mrb[0].mxu0 %v558
        %v846 = vpop.f32.mrb[0].mxu0
        %v847 = vadd.f32 0.0, %v846
        %v848 = vpop.f32.mrb[0].mxu0
        %849 = vmatprep.mubr.f32.mxu0 0.0
        %850 = vmatmul.mubr.f32.gmra.mrb[0].mxu0 %v561
        %v851 = vpop.f32.mrb[0].mxu0
        %v852 = vadd.f32 0.0, %v851
        %v853 = vpop.f32.mrb[0].mxu0
        %854 = vmatprep.mubr.f32.mxu0 0.0
        %855 = vmatmul.mubr.f32.gmra.mrb[0].mxu0 %v564
        %v856 = vpop.f32.mrb[0].mxu0
        %v857 = vadd.f32 0.0, %v856
        %v858 = vpop.f32.mrb[0].mxu0
        %859 = vmatprep.mubr.f32.mxu0 0.0
        %860 = vmatmul.mubr.f32.gmra.mrb[0].mxu0 %v567
        %v861 = vpop.f32.mrb[0].mxu0
        %v862 = vadd.f32 0.0, %v861
        %v863 = vpop.f32.mrb[0].mxu0
        %864 = vmatprep.mubr.f32.mxu0 0.0
        %865 = vmatmul.mubr.f32.gmra.mrb[0].mxu0 %v570
        %v866 = vpop.f32.mrb[0].mxu0
        %v867 = vadd.f32 0.0, %v866
        %v868 = vpop.f32.mrb[0].mxu0
        %869 = vmatprep.mubr.f32.mxu0 0.0
        %870 = vmatmul.mubr.f32.gmra.mrb[0].mxu0 %v573
        %v871 = vpop.f32.mrb[0].mxu0
        %v872 = vadd.f32 0.0, %v871
        %v873 = vpop.f32.mrb[0].mxu0
        %874 = vmatprep.mubr.f32.mxu0 0.0
        %875 = vmatmul.mubr.f32.gmra.mrb[0].mxu0 %v576
        %v876 = vpop.f32.mrb[0].mxu0
        %v877 = vadd.f32 0.0, %v876
        %v878 = vpop.f32.mrb[0].mxu0
        %879 = vmatprep.mubr.f32.mxu0 0.0
        %880 = vmatmul.mubr.f32.gmra.mrb[0].mxu0 %v579
        %v881 = vpop.f32.mrb[0].mxu0
        %v882 = vadd.f32 0.0, %v881
        %v883 = vpop.f32.mrb[0].mxu0
        %884 = vmatprep.mubr.f32.mxu0 0.0
        %885 = vmatmul.mubr.f32.gmra.mrb[0].mxu0 %v582
        %v886 = vpop.f32.mrb[0].mxu0
        %v887 = vadd.f32 0.0, %v886
        %v888 = vpop.f32.mrb[0].mxu0
        %889 = vmatprep.mubr.f32.mxu0 0.0
        %890 = vmatmul.mubr.f32.gmra.mrb[0].mxu0 %v585
        %v891 = vpop.f32.mrb[0].mxu0
        %v892 = vadd.f32 0.0, %v891
        %v893 = vpop.f32.mrb[0].mxu0
        %894 = vdwg.mxu0
        %v895 = vpack.c.bf16 %v662, %v657
        %v896 = vpack.c.bf16 %v672, %v667
        %v897 = vpack.c.bf16 %v682, %v677
        %v898 = vpack.c.bf16 %v692, %v687
        %v899 = vpack.c.bf16 %v702, %v697
        %v900 = vpack.c.bf16 %v712, %v707
        %v901 = vpack.c.bf16 %v722, %v717
        %v902 = vpack.c.bf16 %v732, %v727
        %v903 = vpack.c.bf16 %v742, %v737
        %v904 = vpack.c.bf16 %v752, %v747
        %v905 = vpack.c.bf16 %v762, %v757
        %v906 = vpack.c.bf16 %v772, %v767
        %v907 = vpack.c.bf16 %v782, %v777
        %v908 = vpack.c.bf16 %v792, %v787
        %v909 = vpack.c.bf16 %v802, %v797
        %v910 = vpack.c.bf16 %v812, %v807
        %v911 = vpack.c.bf16 %v822, %v817
        %v912 = vpack.c.bf16 %v832, %v827
        %v913 = vpack.c.bf16 %v842, %v837
        %v914 = vpack.c.bf16 %v852, %v847
        %v915 = vpack.c.bf16 %v862, %v857
        %v916 = vpack.c.bf16 %v872, %v867
        %v917 = vpack.c.bf16 %v882, %v877
        %v918 = vpack.c.bf16 %v892, %v887
        %v943 = vunpack.c.l.b16 %v895
        %v944 = vunpack.c.h.b16 %v895
        %v945 = vunpack.c.l.b16 %v896
        %v946 = vunpack.c.h.b16 %v896
        %v947 = vunpack.c.l.b16 %v897
        %v948 = vunpack.c.h.b16 %v897
        %v949 = vunpack.c.l.b16 %v898
        %v950 = vunpack.c.h.b16 %v898
        %v951 = vunpack.c.l.b16 %v899
        %v952 = vunpack.c.h.b16 %v899
        %v953 = vunpack.c.l.b16 %v900
        %v954 = vunpack.c.h.b16 %v900
        %v955 = vunpack.c.l.b16 %v901
        %v956 = vunpack.c.h.b16 %v901
        %v957 = vunpack.c.l.b16 %v902
        %v958 = vunpack.c.h.b16 %v902
        %v959 = vunpack.c.l.b16 %v903
        %v960 = vunpack.c.h.b16 %v903
        %v961 = vunpack.c.l.b16 %v904
        %v962 = vunpack.c.h.b16 %v904
        %v963 = vunpack.c.l.b16 %v905
        %v964 = vunpack.c.h.b16 %v905
        %v965 = vunpack.c.l.b16 %v906
        %v966 = vunpack.c.h.b16 %v906
        %v967 = vunpack.c.l.b16 %v907
        %v968 = vunpack.c.h.b16 %v907
        %v969 = vunpack.c.l.b16 %v908
        %v970 = vunpack.c.h.b16 %v908
        %v971 = vunpack.c.l.b16 %v909
        %v972 = vunpack.c.h.b16 %v909
        %v973 = vunpack.c.l.b16 %v910
        %v974 = vunpack.c.h.b16 %v910
        %v975 = vunpack.c.l.b16 %v911
        %v976 = vunpack.c.h.b16 %v911
        %v977 = vunpack.c.l.b16 %v912
        %v978 = vunpack.c.h.b16 %v912
        %v979 = vunpack.c.l.b16 %v913
        %v980 = vunpack.c.h.b16 %v913
        %v981 = vunpack.c.l.b16 %v914
        %v982 = vunpack.c.h.b16 %v914
        %v983 = vunpack.c.l.b16 %v915
        %v984 = vunpack.c.h.b16 %v915
        %v985 = vunpack.c.l.b16 %v916
        %v986 = vunpack.c.h.b16 %v916
        %v987 = vunpack.c.l.b16 %v917
        %v988 = vunpack.c.h.b16 %v917
        %v989 = vunpack.c.l.b16 %v918
        %v990 = vunpack.c.h.b16 %v918
        %v991 = vpack.c.b16 %v943, %v943
        %v992 = vpack.c.b16 %v944, %v944
        %v993 = vpack.c.b16 %v945, %v945
        %v994 = vpack.c.b16 %v946, %v946
        %v995 = vpack.c.b16 %v947, %v947
        %v996 = vpack.c.b16 %v948, %v948
        %v997 = vpack.c.b16 %v949, %v949
        %v998 = vpack.c.b16 %v950, %v950
        %v999 = vpack.c.b16 %v951, %v951
        %v1000 = vpack.c.b16 %v952, %v952
        %v1001 = vpack.c.b16 %v953, %v953
        %v1002 = vpack.c.b16 %v954, %v954
        %v1003 = vpack.c.b16 %v955, %v955
        %v1004 = vpack.c.b16 %v956, %v956
        %v1005 = vpack.c.b16 %v957, %v957
        %v1006 = vpack.c.b16 %v958, %v958
        %v1007 = vpack.c.b16 %v959, %v959
        %v1008 = vpack.c.b16 %v960, %v960
        %v1009 = vpack.c.b16 %v961, %v961
        %v1010 = vpack.c.b16 %v962, %v962
        %v1011 = vpack.c.b16 %v963, %v963
        %v1012 = vpack.c.b16 %v964, %v964
        %v1013 = vpack.c.b16 %v965, %v965
        %v1014 = vpack.c.b16 %v966, %v966
        %v1015 = vpack.c.b16 %v967, %v967
        %v1016 = vpack.c.b16 %v968, %v968
        %v1017 = vpack.c.b16 %v969, %v969
        %v1018 = vpack.c.b16 %v970, %v970
        %v1019 = vpack.c.b16 %v971, %v971
        %v1020 = vpack.c.b16 %v972, %v972
        %v1021 = vpack.c.b16 %v973, %v973
        %v1022 = vpack.c.b16 %v974, %v974
        %v1023 = vpack.c.b16 %v975, %v975
        %v1024 = vpack.c.b16 %v976, %v976
        %v1025 = vpack.c.b16 %v977, %v977
        %v1026 = vpack.c.b16 %v978, %v978
        %v1027 = vpack.c.b16 %v979, %v979
        %v1028 = vpack.c.b16 %v980, %v980
        %v1029 = vpack.c.b16 %v981, %v981
        %v1030 = vpack.c.b16 %v982, %v982
        %v1031 = vpack.c.b16 %v983, %v983
        %v1032 = vpack.c.b16 %v984, %v984
        %v1033 = vpack.c.b16 %v985, %v985
        %v1034 = vpack.c.b16 %v986, %v986
        %v1035 = vpack.c.b16 %v987, %v987
        %v1036 = vpack.c.b16 %v988, %v988
        %v1037 = vpack.c.b16 %v989, %v989
        %v1038 = vpack.c.b16 %v990, %v990
        %1087 = vst [vmem:[%s245] sm:$0xf] %v991
        %1088 = vst [vmem:[%s245 + $0x4] sm:$0xf] %v992
        %1089 = vst [vmem:[%s245 + $0x8] sm:$0xf] %v993
        %1090 = vst [vmem:[%s245 + $0xc] sm:$0xf] %v994
        %1091 = vst [vmem:[%s245 + $0x10] sm:$0xf] %v995
        %1092 = vst [vmem:[%s245 + $0x14] sm:$0xf] %v996
        %1093 = vst [vmem:[%s245 + $0x18] sm:$0xf] %v997
        %1094 = vst [vmem:[%s245 + $0x1c] sm:$0xf] %v998
        %1095 = vst [vmem:[%s245 + $0x20] sm:$0xf] %v999
        %1096 = vst [vmem:[%s245 + $0x24] sm:$0xf] %v1000
        %1097 = vst [vmem:[%s245 + $0x28] sm:$0xf] %v1001
        %1098 = vst [vmem:[%s245 + $0x2c] sm:$0xf] %v1002
        %1099 = vst [vmem:[%s245 + $0x30] sm:$0xf] %v1003
        %1100 = vst [vmem:[%s245 + $0x34] sm:$0xf] %v1004
        %1101 = vst [vmem:[%s245 + $0x38] sm:$0xf] %v1005
        %1102 = vst [vmem:[%s245 + $0x3c] sm:$0xf] %v1006
        %1103 = vst [vmem:[%s245 + $0x40] sm:$0xf] %v1007
        %1104 = vst [vmem:[%s245 + $0x44] sm:$0xf] %v1008
        %1105 = vst [vmem:[%s245 + $0x48] sm:$0xf] %v1009
        %1106 = vst [vmem:[%s245 + $0x4c] sm:$0xf] %v1010
        %1107 = vst [vmem:[%s245 + $0x50] sm:$0xf] %v1011
        %1108 = vst [vmem:[%s245 + $0x54] sm:$0xf] %v1012
        %1109 = vst [vmem:[%s245 + $0x58] sm:$0xf] %v1013
        %1110 = vst [vmem:[%s245 + $0x5c] sm:$0xf] %v1014
        %1111 = vst [vmem:[%s245 + $0x60] sm:$0xf] %v1015
        %1112 = vst [vmem:[%s245 + $0x64] sm:$0xf] %v1016
        %1113 = vst [vmem:[%s245 + $0x68] sm:$0xf] %v1017
        %1114 = vst [vmem:[%s245 + $0x6c] sm:$0xf] %v1018
        %1115 = vst [vmem:[%s245 + $0x70] sm:$0xf] %v1019
        %1116 = vst [vmem:[%s245 + $0x74] sm:$0xf] %v1020
        %1117 = vst [vmem:[%s245 + $0x78] sm:$0xf] %v1021
        %1118 = vst [vmem:[%s245 + $0x7c] sm:$0xf] %v1022
        %1119 = vst [vmem:[%s245 + $0x80] sm:$0xf] %v1023
        %1120 = vst [vmem:[%s245 + $0x84] sm:$0xf] %v1024
        %1121 = vst [vmem:[%s245 + $0x88] sm:$0xf] %v1025
        %1122 = vst [vmem:[%s245 + $0x8c] sm:$0xf] %v1026
        %1123 = vst [vmem:[%s245 + $0x90] sm:$0xf] %v1027
        %1124 = vst [vmem:[%s245 + $0x94] sm:$0xf] %v1028
        %1125 = vst [vmem:[%s245 + $0x98] sm:$0xf] %v1029
        %1126 = vst [vmem:[%s245 + $0x9c] sm:$0xf] %v1030
        %1127 = vst [vmem:[%s245 + $0xa0] sm:$0xf] %v1031
        %1128 = vst [vmem:[%s245 + $0xa4] sm:$0xf] %v1032
        %1129 = vst [vmem:[%s245 + $0xa8] sm:$0xf] %v1033
        %1130 = vst [vmem:[%s245 + $0xac] sm:$0xf] %v1034
        %1131 = vst [vmem:[%s245 + $0xb0] sm:$0xf] %v1035
        %1132 = vst [vmem:[%s245 + $0xb4] sm:$0xf] %v1036
        %1133 = vst [vmem:[%s245 + $0xb8] sm:$0xf] %v1037
        %1134 = vst [vmem:[%s245 + $0xbc] sm:$0xf] %v1038
        %s1135 = sand.u32 %s125, 1
        %s1136 = scalar_lea.sflag [#allocation3], %s1135
        %s1137 = sand.u32 %s125, 1
        %s1138 = smul.addr %s1137, 64
        %s1139 = scalar_lea.vmem [#allocation2], %s1138
        %s1140 = sand.u32 %s151, 1
        %s1141 = scalar_lea.sflag [#allocation5], %s1140
        %s1142 = sand.u32 %s151, 1
        %s1143 = smul.addr %s1142, 192
        %s1144 = scalar_lea.vmem [#allocation4], %s1143
        // Predicated region
        $region37: #{tpu_custom_call.1} parent=35 // pred_check
          %p1145 = pneg %p135
        $region38: #{tpu_custom_call.1} parent=35 // pred_check_branch
          %1147 = sbr.rel (%p1145) target = $region40
        $region39: #{tpu_custom_call.1} parent=35 // pred_region
          %s1148 = smul.u32 8, %s23
          %s1150 = ssub.s32 1024, 1024
          %1151 = vsyncadd %s1136, %s1150
          %s1152 = smul.addr %s1148, 128
          %s1153 = scalar_lea.hbm %s4, %s1152
          %s1154 = sshll.u32 %s1139, 4
          %s1155 = int_to_ptr.vmem [resolvable:$true] %s1154
          %1160 = dma.vmem_to_hbm [thread:$0]  %s1155, 1024, %s1153, %s1136, 128, 128, 8
        $region40: #{tpu_custom_call.1} parent=35 // pred_fallthru
          _
        // Predicated region
        $region41: #{tpu_custom_call.1} parent=35 // pred_check
          %p1161 = pneg %p161
        $region42: #{tpu_custom_call.1} parent=35 // pred_check_branch
          %1163 = sbr.rel (%p1161) target = $region44
        $region43: #{tpu_custom_call.1} parent=35 // pred_region
          %s1164 = smul.u32 48, %s23
          %s1166 = ssub.s32 3072, 3072
          %1167 = vsyncadd %s1141, %s1166
          %s1168 = smul.addr %s1164, 64
          %s1169 = scalar_lea.hbm %s5, %s1168
          %s1170 = sshll.u32 %s1144, 4
          %s1171 = int_to_ptr.vmem [resolvable:$true] %s1170
          %1176 = dma.vmem_to_hbm [thread:$0]  %s1171, 3072, %s1169, %s1141, 64, 64, 4
        $region44: #{tpu_custom_call.1} parent=35 // pred_fallthru
          _
      $region36: #{tpu_custom_call.1} parent=5 // pred_fallthru
        _
      %p1177 = scmp.le.s32.totalorder 2, %s18
      // Predicated region
      $region45: #{tpu_custom_call.1} parent=5 // pred_check
        %p1178 = pneg %p1177
      $region46: #{tpu_custom_call.1} parent=5 // pred_check_branch
        %1180 = sbr.rel (%p1178) target = $region48
      $region47: #{tpu_custom_call.1} parent=5 // pred_region
        %s1181 = ssub.s32 %s18, 2
        // Predicated region
        $region49: #{tpu_custom_call.1} parent=47 // pred_check
          %p1182 = pneg %p141
        $region50: #{tpu_custom_call.1} parent=47 // pred_check_branch
          %1184 = sbr.rel (%p1182) target = $region52
        $region51: #{tpu_custom_call.1} parent=47 // pred_region
          %s1185 = sand.u32 %s126, 1
          %s1186 = scalar_lea.sflag [#allocation3], %s1185
          %s1187 = sand.u32 %s126, 1
          %s1188 = smul.addr %s1187, 64
          %s1189 = scalar_lea.vmem [#allocation2], %s1188
          %1190 = dma.done %s1186, 1024
        $region52: #{tpu_custom_call.1} parent=47 // pred_fallthru
          _
        // Predicated region
        $region53: #{tpu_custom_call.1} parent=47 // pred_check
          %p1191 = pneg %p167
        $region54: #{tpu_custom_call.1} parent=47 // pred_check_branch
          %1193 = sbr.rel (%p1191) target = $region56
        $region55: #{tpu_custom_call.1} parent=47 // pred_region
          %s1194 = sand.u32 %s152, 1
          %s1195 = scalar_lea.sflag [#allocation5], %s1194
          %s1196 = sand.u32 %s152, 1
          %s1197 = smul.addr %s1196, 192
          %s1198 = scalar_lea.vmem [#allocation4], %s1197
          %1199 = dma.done %s1195, 3072
        $region56: #{tpu_custom_call.1} parent=47 // pred_fallthru
          _
      $region48: #{tpu_custom_call.1} parent=5 // pred_fallthru
        _
    $region6: #{tpu_custom_call.1} parent=1 // loop_footer
      %s22 = sadd.s32 1, %s18
    $region7: #{tpu_custom_call.1} parent=1 // loop_footer_branch
      %17 = sbr.rel target = $region3
    $region8: #{tpu_custom_call.1} parent=1 // loop_exit
      _
    %1200 = vsyncpa [#allocation3], 1
    %s1201 = scalar_lea.sflag [#allocation3], 1
    %1202 = vsyncpa %s1201, 1
    %1203 = vsyncpa [#allocation5], 1
    %s1204 = scalar_lea.sflag [#allocation5], 1
    %1205 = vsyncpa %s1204, 1

</llo_original>
